<compile_context>
chip_gen: v5e
topology: v5e:2x2
jax: 0.10.0
libtpu: 0.0.40
codegen_flags: <defaults>
</compile_context>

<pallas_src>
import math

import jax
import jax.numpy as jnp
from jax.experimental import pallas as pl
from jax.experimental.pallas import tpu as pltpu


# -----------------------------------------------------------------------------
# Kernels
# -----------------------------------------------------------------------------

def tt_fused_kernel(x_ref, w_ref, b_ref, o_ref):
    """Single lane-dense matmul + bias.
    x_ref: (tile_rows, K)  w_ref: (K, Kout)  b_ref: (1, Kout)  o_ref: (tile_rows, Kout)"""
    y = jnp.dot(x_ref[...], w_ref[...], preferred_element_type=jnp.float32)
    o_ref[...] = (y + b_ref[...]).astype(o_ref.dtype)


def tt_two_stage_kernel(x_ref, w23_ref, w01_ref, b_ref, o_ref):
    """Fallback when the dense (f_in, f_out) fusion does not fit in VMEM."""
    t = jnp.dot(x_ref[...], w23_ref[...], preferred_element_type=jnp.float32)
    y = jnp.dot(t, w01_ref[...], preferred_element_type=jnp.float32)
    o_ref[...] = (y + b_ref[...]).astype(o_ref.dtype)


# -----------------------------------------------------------------------------
# Wrapper helpers
# -----------------------------------------------------------------------------

def _round8(n):
    return ((n + 7) // 8) * 8


def _pack_factor(f_in, f_out, max_width=1024, max_weight_bytes=8 << 20):
    """Smallest p with p*f_in and p*f_out both multiples of 128 lanes (or 1)."""
    p_in = 128 // math.gcd(f_in, 128)
    p_out = 128 // math.gcd(f_out, 128)
    p = p_in * p_out // math.gcd(p_in, p_out)
    if p == 1:
        return 1
    if p * max(f_in, f_out) > max_width:
        return 1
    if (p * f_in) * (p * f_out) * 4 > max_weight_bytes:
        return 1
    return p


def _pick_tile_rows(rows, row_bytes_in):
    # ~2 MiB of streamed x per grid step amortizes the ~0.35us per-step overhead.
    t = max(256, min(4096, (2 << 20) // max(1, row_bytes_in)))
    t = min(t, max(rows, 8))
    # Keep >= 2 grid steps when there is enough work so v7x's two TCs both get fed.
    if rows >= 256 and pl.cdiv(rows, t) < 2:
        t = pl.cdiv(rows, 2)
    return _round8(t)


# -----------------------------------------------------------------------------
# Forward pass
# -----------------------------------------------------------------------------

def tt_layer_forward(x, tt_cores, bias, in_shape, out_shape, *,
                     tile_rows=None, compute_dtype=None,
                     fuse_bytes_limit=8 << 20):
    """Pallas TTLayer forward.  x: (N, prod(in_shape)) -> (N, prod(out_shape))."""
    w0, w1, w2, w3 = tt_cores
    A, B = out_shape
    C, D = in_shape
    N = x.shape[0]
    r2 = w2.shape[0]
    f_in, f_out = C * D, A * B
    out_dtype = x.dtype
    hp = jax.lax.Precision.HIGHEST

    # One-time fusion of the static TT cores (tiny einsums, outside the kernel).
    w23 = jnp.einsum('bCc,cD->CDb', w2, w3, precision=hp).reshape(f_in, r2)   # (C*D, r2)
    w01 = jnp.einsum('Aa,aBb->bAB', w0, w1, precision=hp).reshape(r2, f_out)  # (r2, A*B)
    b_flat = bias.reshape(1, f_out).astype(jnp.float32)

    itemsize = jnp.dtype(compute_dtype or x.dtype).itemsize

    if f_in * f_out * 4 <= fuse_bytes_limit:
        # ---------------- fused path: one dense matmul -----------------------
        W = jnp.matmul(w23, w01, precision=hp)                    # (f_in, f_out)

        # Row packing for lane density: p samples per 128-lane physical row.
        p = _pack_factor(f_in, f_out)
        if p > 1 and N % p:
            x = jnp.pad(x, ((0, p - N % p), (0, 0)))              # < p rows, rare
        Np = x.shape[0]
        if p > 1:
            x_k = x.reshape(Np // p, p * f_in)                    # free, row-major
            w_k = jnp.kron(jnp.eye(p, dtype=W.dtype), W)          # block-diagonal
            b_k = jnp.tile(b_flat, (1, p))
        else:
            x_k, w_k, b_k = x, W, b_flat
        rows, k_in, k_out = x_k.shape[0], x_k.shape[1], w_k.shape[1]

        if compute_dtype is not None:
            x_k = x_k.astype(compute_dtype)
            w_k = w_k.astype(compute_dtype)

        tr = tile_rows if tile_rows is not None else _pick_tile_rows(rows, k_in * itemsize)
        tr = _round8(min(tr, max(rows, 8)))
        grid = (pl.cdiv(rows, tr),)

        resident = (k_in * k_out) * jnp.dtype(w_k.dtype).itemsize + k_out * 4
        vmem_need = 2 * tr * (k_in + k_out) * itemsize + 2 * resident
        vmem_limit = int(min(64 << 20, max(8 << 20, 2 * vmem_need)))

        out = pl.pallas_call(
            tt_fused_kernel,
            out_shape=jax.ShapeDtypeStruct((rows, k_out), out_dtype),
            grid=grid,
            in_specs=[
                pl.BlockSpec((tr, k_in), lambda i: (i, 0)),      # x tile (pipelined)
                pl.BlockSpec((k_in, k_out), lambda i: (0, 0)),   # fused weight (resident)
                pl.BlockSpec((1, k_out), lambda i: (0, 0)),      # bias (resident)
            ],
            out_specs=pl.BlockSpec((tr, k_out), lambda i: (i, 0)),
            compiler_params=pltpu.CompilerParams(
                dimension_semantics=("parallel",),
                vmem_limit_bytes=vmem_limit),
            cost_estimate=pl.CostEstimate(
                flops=2 * rows * k_in * k_out,
                transcendentals=0,
                bytes_accessed=rows * (k_in + k_out) * itemsize + resident),
        )(x_k, w_k, b_k)

        if p > 1:
            out = out.reshape(Np, f_out)                          # free, row-major
        return out[:N] if out.shape[0] != N else out

    # ---------------- two-stage fallback (huge production TT shapes) ---------
    # TODO(synk): restructure hierarchically so no stage is left with K = r2
    # (fold the B index into the row dimension) for MXU-friendly contractions.
    if compute_dtype is not None:
        x = x.astype(compute_dtype)
        w23 = w23.astype(compute_dtype)
        w01 = w01.astype(compute_dtype)
    tr = tile_rows if tile_rows is not None else _pick_tile_rows(N, f_in * itemsize)
    tr = _round8(min(tr, max(N, 8)))
    grid = (pl.cdiv(N, tr),)
    resident = (f_in * r2 + r2 * f_out) * jnp.dtype(w23.dtype).itemsize + f_out * 4
    vmem_need = 2 * tr * (f_in + f_out) * itemsize + 2 * resident
    vmem_limit = int(min(64 << 20, max(8 << 20, 2 * vmem_need)))

    out = pl.pallas_call(
        tt_two_stage_kernel,
        out_shape=jax.ShapeDtypeStruct((N, f_out), out_dtype),
        grid=grid,
        in_specs=[
            pl.BlockSpec((tr, f_in), lambda i: (i, 0)),
            pl.BlockSpec((f_in, r2), lambda i: (0, 0)),
            pl.BlockSpec((r2, f_out), lambda i: (0, 0)),
            pl.BlockSpec((1, f_out), lambda i: (0, 0)),
        ],
        out_specs=pl.BlockSpec((tr, f_out), lambda i: (i, 0)),
        compiler_params=pltpu.CompilerParams(
            dimension_semantics=("parallel",),
            vmem_limit_bytes=vmem_limit),
        cost_estimate=pl.CostEstimate(
            flops=2 * N * r2 * (f_in + f_out),
            transcendentals=0,
            bytes_accessed=N * (f_in + f_out) * itemsize + resident),
    )(x, w23, w01, b_flat)
    return out


if __name__ == "__main__":
    # Small shapes consistent with the module: in_shape=(4,8), out_shape=(4,8).
    in_shape = (4, 8)      # (C, D)
    out_shape = (4, 8)     # (A, B)
    bond_dims = (3, 5, 6)  # (r1, r2, r3) -- valid TT ranks for these dims
    batch = 12             # packed rows = 3 < one 8-row tile: exercises ragged masking

    A, Bd = out_shape
    C, D = in_shape
    r1, r2, r3 = bond_dims

    # TODO(synk): TT_SVD (torch.linalg.svd / matrix_rank) is init-time decomposition,
    # not part of the forward pass; cores are initialized deterministically instead.
    key = jax.random.PRNGKey(0)
    k0, k1, k2, k3, kb, kx = jax.random.split(key, 6)
    w0 = jax.random.normal(k0, (A, r1), jnp.float32) * 0.5        # tt_W0
    w1 = jax.random.normal(k1, (r1, Bd, r2), jnp.float32) * 0.5   # tt_W1
    w2 = jax.random.normal(k2, (r2, C, r3), jnp.float32) * 0.5    # tt_W2
    w3 = jax.random.normal(k3, (r3, D), jnp.float32) * 0.5        # tt_W3
    bias = jax.random.normal(kb, out_shape, jnp.float32) * 0.1    # B
    x = jax.random.normal(kx, (batch, C * D), jnp.float32)

    out = tt_layer_forward(x, (w0, w1, w2, w3), bias, in_shape, out_shape)
    out = jax.block_until_ready(out)

    # Reference: exactly the einsum TTLayer._make_equation builds for 2-D in/out shapes.
    x3 = x.reshape(batch, C, D)
    ref = jnp.einsum('NCD,Aa,aBb,bCc,cD->NAB', x3, w0, w1, w2, w3) + bias
    ref = ref.reshape(batch, A * Bd)

    assert out.shape == (batch, A * Bd)
    err = float(jnp.max(jnp.abs(out - ref)))
    assert jnp.allclose(out, ref, rtol=1e-4, atol=1e-3), f"max abs err {err}"
    print("KERNEL_OK")
</pallas_src>

<mosaic_0001>
module attributes {stable_mosaic.version = 11 : i64} {
  func.func @tt_fused_kernel(%arg0: i32, %arg1: memref<8x128xf32, #tpu.memory_space<vmem>>, %arg2: memref<128x128xf32, #tpu.memory_space<vmem>>, %arg3: memref<1x128xf32, #tpu.memory_space<vmem>>, %arg4: memref<8x128xf32, #tpu.memory_space<vmem>>) attributes {dimension_semantics = [#tpu.dimension_semantics<parallel>], iteration_bounds = array<i64: 1>, scalar_prefetch = 0 : i64, scratch_operands = 0 : i64, tpu.core_type = #tpu.core_type<tc>, window_params = [{transform_indices = @transform_0, window_bounds = array<i64: 8, 128>}, {pipeline_mode = #tpu.pipeline_mode<synchronous>, transform_indices = @transform_1, window_bounds = array<i64: 128, 128>}, {pipeline_mode = #tpu.pipeline_mode<synchronous>, transform_indices = @transform_2, window_bounds = array<i64: 1, 128>}, {transform_indices = @transform_3, window_bounds = array<i64: 8, 128>}]} {
    %c0 = arith.constant 0 : index
    %c0_0 = arith.constant 0 : index
    %0 = vector.load %arg1[%c0, %c0_0] : memref<8x128xf32, #tpu.memory_space<vmem>>, vector<8x128xf32>
    %c0_1 = arith.constant 0 : index
    %c0_2 = arith.constant 0 : index
    %1 = vector.load %arg2[%c0_1, %c0_2] : memref<128x128xf32, #tpu.memory_space<vmem>>, vector<128x128xf32>
    %cst = arith.constant dense<0.000000e+00> : vector<8x128xf32>
    %2 = tpu.matmul %0, %1, %cst {dimension_numbers = #tpu.dot_dimension_numbers<[1], [0], [0], [1], [0, 0, 1, 1], [], []>} : vector<8x128xf32>, vector<128x128xf32>, vector<8x128xf32> -> vector<8x128xf32>
    %c0_3 = arith.constant 0 : index
    %c0_4 = arith.constant 0 : index
    %3 = vector.load %arg3[%c0_3, %c0_4] : memref<1x128xf32, #tpu.memory_space<vmem>>, vector<1x128xf32>
    %4 = vector.broadcast %3 : vector<1x128xf32> to vector<8x128xf32>
    %5 = arith.addf %2, %4 : vector<8x128xf32>
    %c0_5 = arith.constant 0 : index
    %c0_6 = arith.constant 0 : index
    %6 = vector.load %arg4[%c0_5, %c0_6] : memref<8x128xf32, #tpu.memory_space<vmem>>, vector<8x128xf32>
    tpu.vector_store %arg4[%c0_5, %c0_6], %5 {strides = array<i32>} : memref<8x128xf32, #tpu.memory_space<vmem>>, vector<8x128xf32>,
    return
  }
  func.func @transform_0(%arg0: i32) -> (i32, i32) {
    %c0_i32 = arith.constant 0 : i32
    %c0_i32_0 = arith.constant 0 : i32
    return %arg0, %c0_i32 : i32, i32
  }
  func.func @transform_1(%arg0: i32) -> (i32, i32) {
    %c0_i32 = arith.constant 0 : i32
    %c0_i32_0 = arith.constant 0 : i32
    %c0_i32_1 = arith.constant 0 : i32
    return %c0_i32, %c0_i32_0 : i32, i32
  }
  func.func @transform_2(%arg0: i32) -> (i32, i32) {
    %c0_i32 = arith.constant 0 : i32
    %c0_i32_0 = arith.constant 0 : i32
    %c0_i32_1 = arith.constant 0 : i32
    return %c0_i32, %c0_i32_0 : i32, i32
  }
  func.func @transform_3(%arg0: i32) -> (i32, i32) {
    %c0_i32 = arith.constant 0 : i32
    %c0_i32_0 = arith.constant 0 : i32
    return %arg0, %c0_i32 : i32, i32
  }
}

</mosaic_0001>

<llo_original>
// kernel: tpu_custom_call.1
$region0: #{tpu_custom_call.1}
  #allocation0 [shape = 'u32[]', space=smem, size = 0x4, offset = 0x4, fixed_abs, tag = 'smem constant byte address 0x4 - core index']
  #allocation1 [shape = 'u32[72,128]{1,0:T(1,128)}', space=vmem, size = 0x9000, scoped, tag = 'internal scratch']
  %s0 = inlined_call_operand.hbm [shape: f32[3,128], index: 0, kind: input, shape index: {}]
  %s1 = inlined_call_operand.hbm [shape: f32[128,128], index: 1, kind: input, shape index: {}]
  %s2 = inlined_call_operand.vmem [shape: f32[1,128], index: 2, kind: input, shape index: {}]
  %s3 = inlined_call_operand.hbm [shape: f32[3,128], index: 3, kind: output, shape index: {}]
  %s4 = sld [smem:[#allocation0]]
  $region30: #{tpu_custom_call.1} parent=0
    _
  %s6 = ssub.s32 1, %s4
  %s7 = scalar_select 0, %s6, %s4
  $region1: #{tpu_custom_call.1} parent=0
    #allocation2 [shape = 'u8[4096]{0}', space=vmem, size = 0x1000, scoped, tag = 'input window, operand 0, single buffered']
    #allocation3 [shape = 's32[1]{0}', space=sflag, size = 0x4, scoped, tag = 'scoped memory for tpu_custom_call.1']
    #allocation4 [shape = 's32[1]{0}', space=sflag, size = 0x4, scoped, tag = 'scoped memory for tpu_custom_call.1']
    #allocation5 [shape = 'u8[65536]{0}', space=vmem, size = 0x10000, scoped, tag = 'input window, operand 1, single buffered']
    #allocation6 [shape = 's32[1]{0}', space=sflag, size = 0x4, scoped, tag = 'scoped memory for tpu_custom_call.1']
    #allocation7 [shape = 'u8[4096]{0}', space=vmem, size = 0x1000, scoped, tag = 'output window, operand 0, single buffered']
    %8 = vsyncpa [#allocation3], 0
    %9 = vsyncpa [#allocation6], 0
    %10 = vsyncpa [#allocation4], 0
    // Predicated region
    $region2: #{tpu_custom_call.1} parent=1 // pred_check
      _
    $region3: #{tpu_custom_call.1} parent=1 // pred_check_branch
      %12 = sbr.rel (0) target = $region5
    $region4: #{tpu_custom_call.1} parent=1 // pred_region
      %14 = vsyncadd [#allocation3], 64
      %s15 = sshll.u32 %s0, 4
      %s16 = int_to_ptr.hbm [resolvable:$true] %s15
      %s17 = sshll.u32 [#allocation2], 4
      %s18 = int_to_ptr.vmem [resolvable:$true] %s17
      %23 = dma.hbm_to_vmem [thread:$0]  %s16, 64, %s18, [#allocation3], 64, 64, 4
    $region5: #{tpu_custom_call.1} parent=1 // pred_fallthru
      _
    // Predicated region
    $region6: #{tpu_custom_call.1} parent=1 // pred_check
      _
    $region7: #{tpu_custom_call.1} parent=1 // pred_check_branch
      %25 = sbr.rel (0) target = $region9
    $region8: #{tpu_custom_call.1} parent=1 // pred_region
      %27 = vsyncadd [#allocation6], 0
      %s28 = sshll.u32 %s1, 4
      %s29 = int_to_ptr.hbm [resolvable:$true] %s28
      %s30 = sshll.u32 [#allocation5], 4
      %s31 = int_to_ptr.vmem [resolvable:$true] %s30
      %36 = dma.hbm_to_vmem [thread:$0]  %s29, 2048, %s31, [#allocation6], 128, 128, 8
    $region9: #{tpu_custom_call.1} parent=1 // pred_fallthru
      _
    // Predicated region
    $region10: #{tpu_custom_call.1} parent=1 // pred_check
      _
    $region11: #{tpu_custom_call.1} parent=1 // pred_check_branch
      %38 = sbr.rel (0) target = $region13
    $region12: #{tpu_custom_call.1} parent=1 // pred_region
      _
    $region13: #{tpu_custom_call.1} parent=1 // pred_fallthru
      _
    // Predicated region
    $region14: #{tpu_custom_call.1} parent=1 // pred_check
      _
    $region15: #{tpu_custom_call.1} parent=1 // pred_check_branch
      %40 = sbr.rel (0) target = $region17
    $region16: #{tpu_custom_call.1} parent=1 // pred_region
      %42 = dma.done [#allocation3], 128
    $region17: #{tpu_custom_call.1} parent=1 // pred_fallthru
      _
    // Predicated region
    $region18: #{tpu_custom_call.1} parent=1 // pred_check
      _
    $region19: #{tpu_custom_call.1} parent=1 // pred_check_branch
      %44 = sbr.rel (0) target = $region21
    $region20: #{tpu_custom_call.1} parent=1 // pred_region
      %46 = dma.done [#allocation6], 2048
    $region21: #{tpu_custom_call.1} parent=1 // pred_fallthru
      _
    %v47 = vld [vmem:[#allocation2] sm:$0xff]
    %v48 = vld [vmem:[#allocation5] sm:$0xff]
    %v49 = vld [vmem:[#allocation5 + $0x8] sm:$0xff]
    %v50 = vld [vmem:[#allocation5 + $0x10] sm:$0xff]
    %v51 = vld [vmem:[#allocation5 + $0x18] sm:$0xff]
    %v52 = vld [vmem:[#allocation5 + $0x20] sm:$0xff]
    %v53 = vld [vmem:[#allocation5 + $0x28] sm:$0xff]
    %v54 = vld [vmem:[#allocation5 + $0x30] sm:$0xff]
    %v55 = vld [vmem:[#allocation5 + $0x38] sm:$0xff]
    %v56 = vld [vmem:[#allocation5 + $0x40] sm:$0xff]
    %v57 = vld [vmem:[#allocation5 + $0x48] sm:$0xff]
    %v58 = vld [vmem:[#allocation5 + $0x50] sm:$0xff]
    %v59 = vld [vmem:[#allocation5 + $0x58] sm:$0xff]
    %v60 = vld [vmem:[#allocation5 + $0x60] sm:$0xff]
    %v61 = vld [vmem:[#allocation5 + $0x68] sm:$0xff]
    %v62 = vld [vmem:[#allocation5 + $0x70] sm:$0xff]
    %v63 = vld [vmem:[#allocation5 + $0x78] sm:$0xff]
    %v64 = vld [vmem:[%s2] sm:$0x1]
    %v66 = vperm.slane %v64, 0
    %68 = vmatpush.msra.mxu0 %v63
    %69 = vmatpush.msra.mxu0 %v62
    %70 = vmatpush.msra.mxu0 %v61
    %71 = vmatpush.msra.mxu0 %v60
    %72 = vmatpush.msra.mxu0 %v59
    %73 = vmatpush.msra.mxu0 %v58
    %74 = vmatpush.msra.mxu0 %v57
    %75 = vmatpush.msra.mxu0 %v56
    %76 = vmatpush.msra.mxu0 %v55
    %77 = vmatpush.msra.mxu0 %v54
    %78 = vmatpush.msra.mxu0 %v53
    %79 = vmatpush.msra.mxu0 %v52
    %80 = vmatpush.msra.mxu0 %v51
    %81 = vmatpush.msra.mxu0 %v50
    %82 = vmatpush.msra.mxu0 %v49
    %83 = vmatpush.msra.mxu0 %v48
    %84 = vmatmul.f32.gmra.mxu0 %v47
    %v85 = vpop.f32.mrf.mxu0
    %v86 = vadd.f32 %v66, %v85
    %87 = vdwg.mxu0
    %88 = vst [vmem:[#allocation7] sm:$0xff] %v86
    // Predicated region
    $region22: #{tpu_custom_call.1} parent=1 // pred_check
      _
    $region23: #{tpu_custom_call.1} parent=1 // pred_check_branch
      %90 = sbr.rel (0) target = $region25
    $region24: #{tpu_custom_call.1} parent=1 // pred_region
      %92 = vsyncadd [#allocation4], 64
      %s93 = sshll.u32 [#allocation7], 4
      %s94 = int_to_ptr.vmem [resolvable:$true] %s93
      %s95 = sshll.u32 %s3, 4
      %s96 = int_to_ptr.hbm [resolvable:$true] %s95
      %101 = dma.vmem_to_hbm [thread:$0]  %s94, 64, %s96, [#allocation4], 64, 64, 4
    $region25: #{tpu_custom_call.1} parent=1 // pred_fallthru
      _
    // Predicated region
    $region26: #{tpu_custom_call.1} parent=1 // pred_check
      _
    $region27: #{tpu_custom_call.1} parent=1 // pred_check_branch
      %103 = sbr.rel (0) target = $region29
    $region28: #{tpu_custom_call.1} parent=1 // pred_region
      %105 = dma.done [#allocation4], 128
    $region29: #{tpu_custom_call.1} parent=1 // pred_fallthru
      _
    %106 = vsyncpa [#allocation3], 1
    %107 = vsyncpa [#allocation6], 1
    %108 = vsyncpa [#allocation4], 1

</llo_original>
